<compile_context>
chip_gen: v6e
topology: v6e:2x2x1
jax: 0.10.0
libtpu: 0.0.40
codegen_flags: <defaults>
</compile_context>

<pallas_src>
import functools

import jax
import jax.numpy as jnp
from jax.experimental import pallas as pl
from jax.experimental.pallas import tpu as pltpu

_BIG = 1e30    # finite f32-safe sentinel for masked / padded entries
_EPS = 1e-12   # torch's .clamp(min=1e-12)

_VMEM_TILE_BUDGET = 44 * 2**20   # working-set target (conservative for v7x: 64 MiB VMEM/TC)
_VMEM_LIMIT_CAP = 56 * 2**20
_VMEM_LIMIT_FLOOR = 32 * 2**20


def _round_up(x, m):
    return (x + m - 1) // m * m


def _triplet_mining_kernel(
    xa_ref,    # (TM, D)  anchor feature tile                    (feature dtype)
    la_ref,    # (1, TM)  anchor labels                          (int32, lane-dense)
    sa_ref,    # (1, TM)  anchor squared norms                   (f32,  lane-dense)
    xc_ref,    # (TN, D)  candidate feature tile                 (feature dtype)
    lc_ref,    # (TN, 1)  candidate labels (-1 in padded rows)   (int32)
    sc_ref,    # (TN, 1)  candidate squared norms (1e30 padded)  (f32)
    out_ref,   # (1, TM)  per-anchor hinge loss                  (f32, lane-dense)
    ap2_ref,   # (1, TM)  scratch: running max of positive dist^2
    an2_ref,   # (1, TM)  scratch: running min of negative dist^2
    *,
    margin,
):
    j = pl.program_id(1)

    @pl.when(j == 0)
    def _init():
        ap2_ref[...] = jnp.full_like(ap2_ref, -_BIG)
        an2_ref[...] = jnp.full_like(an2_ref, _BIG)

    # Gram tile G[c, a] = <x_c, x_a>: contract the lane (feature) dim of both operands —
    # the standard flash-attention q.k^T dimension numbers, MXU-native, f32 accumulation,
    # no per-step relayout/transpose of the (resident) candidate block.
    gram = jax.lax.dot_general(
        xc_ref[...], xa_ref[...], (((1,), (1,)), ((), ())),
        preferred_element_type=jnp.float32)                               # (TN, TM)

    # Squared pairwise distances, clamped like torch's .clamp(min=1e-12).
    dist2 = jnp.maximum(sc_ref[...] + sa_ref[...] - 2.0 * gram, _EPS)     # (TN, TM)

    # Positive mask.  Padded candidate rows carry label -1 (never equal to a real,
    # non-negative label) and squared norm 1e30, so they can win neither reduction.
    same = lc_ref[...] == la_ref[...]                                     # (TN, TM)

    # Batch-hard mining on *squared* distances (sqrt is monotone; the clamp above commutes).
    # Reductions run along the sublane (candidate) axis -> lane-dense (1, TM) results.
    ap2_ref[...] = jnp.maximum(
        ap2_ref[...],
        jnp.max(jnp.where(same, dist2, -_BIG), axis=0, keepdims=True))
    an2_ref[...] = jnp.minimum(
        an2_ref[...],
        jnp.min(jnp.where(same, _BIG, dist2), axis=0, keepdims=True))

    @pl.when(j == pl.num_programs(1) - 1)
    def _finalize():
        # max(., 0) guards padded anchors (no real positive) against sqrt(<0) = NaN.
        dist_ap = jnp.sqrt(jnp.maximum(ap2_ref[...], 0.0))                # 2*TM sqrts total
        dist_an = jnp.sqrt(an2_ref[...])
        # MarginRankingLoss(margin)(dist_an, dist_ap, y=1) per sample.
        out_ref[...] = jnp.maximum(dist_ap - dist_an + jnp.float32(margin), 0.0)


def _pick_tm(n, block_rows):
    """Anchor row-tile size (lane width of the per-anchor vectors)."""
    if block_rows is None:
        if n <= 256:
            return _round_up(n, 8)      # single row tile, minimal padding
        if n < 1024:
            return 128                  # limit padding waste, keep >=2 row tiles
        return 256                      # fill the 256x256 MXU on v6e / v7x
    tm = _round_up(min(int(block_rows), n), 8)
    if tm < n and tm % 128 != 0:
        # Multi-tile row grids need lane-aligned (1, TM) label/norm/output blocks.
        tm = _round_up(n, 8) if n <= 128 else _round_up(tm, 128)
    return tm


def _footprint_bytes(tm, tn, d, feat_bytes, resident):
    """Rough per-step VMEM working set used for tile selection and vmem_limit_bytes."""
    cand_bufs = 1 if resident else 2                    # Buffered(1) when fully resident
    cand = cand_bufs * tn * (d * feat_bytes + 8)        # features + label(i32) + sqnorm(f32)
    anchor = 2 * tm * (d * feat_bytes + 8)              # double-buffered anchor side
    out = 2 * tm * 4
    scratch = 2 * tm * 4
    interm = 4 * tn * tm * 4                            # gram / dist2 / where f32 temporaries
    return cand + anchor + out + scratch + interm


@functools.partial(
    jax.jit, static_argnames=("margin", "block_rows", "block_cols", "use_bf16_gram"))
def triplet_loss(inputs, targets, margin=0.3, block_rows=None, block_cols=None,
                 use_bf16_gram=False):
    """Batch-hard triplet loss (same forward semantics as the PyTorch TripletLoss module).

    inputs:  (N, D) float feature matrix.
    targets: (N,)   integer class labels.
    block_rows / block_cols: optional tile-size overrides (auto-tuned when None).
    use_bf16_gram: run the Gram matmul in bf16 (full-rate MXU) with f32 accumulation;
                   norms stay f32.  Off by default to match the f32 reference exactly.
    """
    n, d = inputs.shape

    x_feat = inputs
    if use_bf16_gram and x_feat.dtype == jnp.float32:
        x_feat = x_feat.astype(jnp.bfloat16)

    # Squared norms computed once, in f32, from the original features (no in-kernel upcast).
    x32 = inputs.astype(jnp.float32)
    sq = jnp.sum(x32 * x32, axis=1)                     # (N,)
    t = targets.astype(jnp.int32)

    # ---------------- tiling & VMEM budgeting ----------------
    tm = _pick_tm(n, block_rows)
    n_pad = _round_up(n, tm)
    pad = n_pad - n

    feat_bytes = jnp.dtype(x_feat.dtype).itemsize
    if block_cols is not None:
        tn = _round_up(min(int(block_cols), n_pad), 8)
        if n_pad % tn:
            tn = n_pad
    elif _footprint_bytes(tm, n_pad, d, feat_bytes, True) <= _VMEM_TILE_BUDGET:
        tn = n_pad                                       # candidate set fully resident
    else:
        # Online (flash-attention style) mining over candidate column tiles.
        tn = tm                                          # tm always divides n_pad
        for c in (8192, 4096, 2048, 1024, 512, 256, 128):
            if c < n_pad and n_pad % c == 0 and \
                    _footprint_bytes(tm, c, d, feat_bytes, False) <= _VMEM_TILE_BUDGET:
                tn = c
                break
    resident = tn == n_pad
    row_tiles = n_pad // tm
    col_tiles = n_pad // tn

    vmem_limit = int(min(
        _VMEM_LIMIT_CAP,
        max(_VMEM_LIMIT_FLOOR,
            1.25 * _footprint_bytes(tm, tn, d, feat_bytes, resident) + 2 * 2**20)))

    # ---------------- padding + sentinel folding (no validity input) ----------------
    sq_a = sq
    sq_c = sq
    if pad:
        t = t - jnp.min(t)                               # labels >= 0 so -1 never matches
        x_feat = jnp.pad(x_feat, ((0, pad), (0, 0)))
        t = jnp.pad(t, (0, pad), constant_values=-1)
        sq_a = jnp.pad(sq, (0, pad))
        sq_c = jnp.pad(sq, (0, pad), constant_values=_BIG)  # padded candidates -> "infinitely far"

    la_row = t.reshape(1, n_pad)                         # anchor labels   (lane-dense)
    sa_row = sq_a.reshape(1, n_pad)                      # anchor sq norms (lane-dense, f32)
    lc_col = t.reshape(n_pad, 1)                         # candidate labels
    sc_col = sq_c.reshape(n_pad, 1)                      # candidate sq norms

    def cand_spec(shape, index_map):
        if resident:
            # Constant block index over the whole grid -> fetched once; single-buffer it so
            # the resident candidate set does not pay 2x VMEM for double buffering.
            return pl.BlockSpec(shape, index_map, pipeline_mode=pl.Buffered(buffer_count=1))
        return pl.BlockSpec(shape, index_map)

    kernel = functools.partial(_triplet_mining_kernel, margin=float(margin))
    hinge = pl.pallas_call(
        kernel,
        out_shape=jax.ShapeDtypeStruct((1, n_pad), jnp.float32),
        grid=(row_tiles, col_tiles),                     # reduction (candidate) axis last
        in_specs=[
            pl.BlockSpec((tm, d), lambda i, j: (i, 0)),  # anchor features
            pl.BlockSpec((1, tm), lambda i, j: (0, i)),  # anchor labels
            pl.BlockSpec((1, tm), lambda i, j: (0, i)),  # anchor squared norms
            cand_spec((tn, d), lambda i, j: (j, 0)),     # candidate features
            cand_spec((tn, 1), lambda i, j: (j, 0)),     # candidate labels
            cand_spec((tn, 1), lambda i, j: (j, 0)),     # candidate squared norms
        ],
        out_specs=pl.BlockSpec((1, tm), lambda i, j: (0, i)),   # lane-dense hinge row
        scratch_shapes=[pltpu.VMEM((1, tm), jnp.float32),       # running max positive dist^2
                        pltpu.VMEM((1, tm), jnp.float32)],      # running min negative dist^2
        compiler_params=pltpu.CompilerParams(
            dimension_semantics=("parallel", "arbitrary"),      # anchor tiles shard across TCs
            vmem_limit_bytes=vmem_limit),
    )(x_feat, la_row, sa_row, x_feat, lc_col, sc_col)

    # Mean over the real anchors (trivial XLA reduction over N scalars).
    return jnp.mean(hinge[0, :n])


def _reference_triplet_loss(inputs, targets, margin=0.3):
    x = inputs.astype(jnp.float32)
    sq = jnp.sum(x * x, axis=1, keepdims=True)
    dist2 = sq + sq.T - 2.0 * (x @ x.T)
    dist = jnp.sqrt(jnp.clip(dist2, 1e-12))
    mask = targets[:, None] == targets[None, :]
    dist_ap = jnp.max(jnp.where(mask, dist, -jnp.inf), axis=1)
    dist_an = jnp.min(jnp.where(mask, jnp.inf, dist), axis=1)
    return jnp.mean(jnp.maximum(dist_ap - dist_an + margin, 0.0))


if __name__ == "__main__":
    key = jax.random.PRNGKey(0)
    d = 32
    k1, k2, k3 = jax.random.split(key, 3)

    # 1) Resident path, no padding: 8 samples, 4 identities x 2.
    x1 = jax.random.normal(k1, (8, d), dtype=jnp.float32)
    t1 = jnp.array([0, 0, 1, 1, 2, 2, 3, 3], dtype=jnp.int32)

    # 2) Padding path (n=10 padded to 16): exercises the -1 label / 1e30 norm sentinels
    #    and the padded-anchor NaN guard.
    x2 = jax.random.normal(k2, (10, d), dtype=jnp.float32)
    t2 = jnp.array([0, 0, 1, 1, 2, 2, 3, 3, 4, 4], dtype=jnp.int32)

    # 3) Column-tiled online-mining path (block_cols=8 -> 2 candidate tiles): exercises the
    #    running max/min accumulators across the "arbitrary" grid axis.
    x3 = jax.random.normal(k3, (16, d), dtype=jnp.float32)
    t3 = jnp.array([0, 0, 1, 1, 2, 2, 3, 3, 4, 4, 5, 5, 6, 6, 7, 7], dtype=jnp.int32)

    cases = [
        (x1, t1, {}),
        (x2, t2, {}),
        (x3, t3, {"block_cols": 8}),
    ]
    for xs, ts, kw in cases:
        loss = triplet_loss(xs, ts, margin=0.3, **kw)
        jax.block_until_ready(loss)
        ref = _reference_triplet_loss(xs, ts, margin=0.3)
        assert jnp.allclose(loss, ref, rtol=1e-5, atol=1e-5), (kw, loss, ref)

    print("KERNEL_OK")
</pallas_src>

<mosaic_0001>
module attributes {stable_mosaic.version = 11 : i64} {
  func.func @_triplet_mining_kernel(%arg0: i32, %arg1: i32, %arg2: memref<8x32xf32, #tpu.memory_space<vmem>>, %arg3: memref<1x8xi32, #tpu.memory_space<vmem>>, %arg4: memref<1x8xf32, #tpu.memory_space<vmem>>, %arg5: memref<8x32xf32, #tpu.memory_space<vmem>>, %arg6: memref<8x1xi32, #tpu.memory_space<vmem>>, %arg7: memref<8x1xf32, #tpu.memory_space<vmem>>, %arg8: memref<1x8xf32, #tpu.memory_space<vmem>>, %arg9: memref<1x8xf32, #tpu.memory_space<vmem>>, %arg10: memref<1x8xf32, #tpu.memory_space<vmem>>) attributes {dimension_semantics = [#tpu.dimension_semantics<parallel>, #tpu.dimension_semantics<arbitrary>], iteration_bounds = array<i64: 1, 1>, scalar_prefetch = 0 : i64, scratch_operands = 2 : i64, tpu.core_type = #tpu.core_type<tc>, window_params = [{transform_indices = @transform_0, window_bounds = array<i64: 8, 32>}, {transform_indices = @transform_1, window_bounds = array<i64: 1, 8>}, {transform_indices = @transform_2, window_bounds = array<i64: 1, 8>}, {pipeline_mode = #tpu.pipeline_mode<synchronous>, transform_indices = @transform_3, window_bounds = array<i64: 8, 32>}, {pipeline_mode = #tpu.pipeline_mode<synchronous>, transform_indices = @transform_4, window_bounds = array<i64: 8, 1>}, {pipeline_mode = #tpu.pipeline_mode<synchronous>, transform_indices = @transform_5, window_bounds = array<i64: 8, 1>}, {transform_indices = @transform_6, window_bounds = array<i64: 1, 8>}]} {
    %c0_i32 = arith.constant 0 : i32
    %0 = arith.cmpi eq, %arg1, %c0_i32 : i32
    %1 = arith.extui %0 : i1 to i32
    %c0_i32_0 = arith.constant 0 : i32
    %2 = arith.cmpi ne, %1, %c0_i32_0 : i32
    scf.if %2 {
      %cst_28 = arith.constant -1.000000e+30 : f32
      %38 = vector.broadcast %cst_28 : f32 to vector<1x8xf32>
      %c0_29 = arith.constant 0 : index
      %c0_30 = arith.constant 0 : index
      %39 = vector.load %arg9[%c0_29, %c0_30] : memref<1x8xf32, #tpu.memory_space<vmem>>, vector<1x8xf32>
      tpu.vector_store %arg9[%c0_29, %c0_30], %38 {strides = array<i32>} : memref<1x8xf32, #tpu.memory_space<vmem>>, vector<1x8xf32>,
      %cst_31 = arith.constant 1.000000e+30 : f32
      %40 = vector.broadcast %cst_31 : f32 to vector<1x8xf32>
      %c0_32 = arith.constant 0 : index
      %c0_33 = arith.constant 0 : index
      %41 = vector.load %arg10[%c0_32, %c0_33] : memref<1x8xf32, #tpu.memory_space<vmem>>, vector<1x8xf32>
      tpu.vector_store %arg10[%c0_32, %c0_33], %40 {strides = array<i32>} : memref<1x8xf32, #tpu.memory_space<vmem>>, vector<1x8xf32>,
    } else {
    }
    %c0 = arith.constant 0 : index
    %c0_1 = arith.constant 0 : index
    %3 = vector.load %arg5[%c0, %c0_1] : memref<8x32xf32, #tpu.memory_space<vmem>>, vector<8x32xf32>
    %c0_2 = arith.constant 0 : index
    %c0_3 = arith.constant 0 : index
    %4 = vector.load %arg2[%c0_2, %c0_3] : memref<8x32xf32, #tpu.memory_space<vmem>>, vector<8x32xf32>
    %cst = arith.constant dense<0.000000e+00> : vector<8x8xf32>
    %5 = tpu.matmul %3, %4, %cst {dimension_numbers = #tpu.dot_dimension_numbers<[1], [1], [0], [0], [0, 0, 1, 0], [], []>} : vector<8x32xf32>, vector<8x32xf32>, vector<8x8xf32> -> vector<8x8xf32>
    %c0_4 = arith.constant 0 : index
    %c0_5 = arith.constant 0 : index
    %6 = vector.load %arg7[%c0_4, %c0_5] : memref<8x1xf32, #tpu.memory_space<vmem>>, vector<8x1xf32>
    %c0_6 = arith.constant 0 : index
    %c0_7 = arith.constant 0 : index
    %7 = vector.load %arg4[%c0_6, %c0_7] : memref<1x8xf32, #tpu.memory_space<vmem>>, vector<1x8xf32>
    %8 = vector.broadcast %6 : vector<8x1xf32> to vector<8x8xf32>
    %9 = vector.broadcast %7 : vector<1x8xf32> to vector<8x8xf32>
    %10 = arith.addf %8, %9 : vector<8x8xf32>
    %cst_8 = arith.constant 2.000000e+00 : f32
    %11 = vector.broadcast %cst_8 : f32 to vector<8x8xf32>
    %12 = arith.mulf %11, %5 : vector<8x8xf32>
    %13 = arith.subf %10, %12 : vector<8x8xf32>
    %cst_9 = arith.constant 9.99999996E-13 : f32
    %14 = vector.broadcast %cst_9 : f32 to vector<8x8xf32>
    %15 = arith.maximumf %13, %14 : vector<8x8xf32>
    %c0_10 = arith.constant 0 : index
    %c0_11 = arith.constant 0 : index
    %16 = vector.load %arg6[%c0_10, %c0_11] : memref<8x1xi32, #tpu.memory_space<vmem>>, vector<8x1xi32>
    %c0_12 = arith.constant 0 : index
    %c0_13 = arith.constant 0 : index
    %17 = vector.load %arg3[%c0_12, %c0_13] : memref<1x8xi32, #tpu.memory_space<vmem>>, vector<1x8xi32>
    %18 = vector.broadcast %16 : vector<8x1xi32> to vector<8x8xi32>
    %19 = vector.broadcast %17 : vector<1x8xi32> to vector<8x8xi32>
    %20 = arith.cmpi eq, %18, %19 : vector<8x8xi32>
    %c0_14 = arith.constant 0 : index
    %c0_15 = arith.constant 0 : index
    %21 = vector.load %arg9[%c0_14, %c0_15] : memref<1x8xf32, #tpu.memory_space<vmem>>, vector<1x8xf32>
    %cst_16 = arith.constant -1.000000e+30 : f32
    %22 = vector.broadcast %cst_16 : f32 to vector<8x8xf32>
    %23 = arith.select %20, %15, %22 : vector<8x8xi1>, vector<8x8xf32>
    %cst_17 = arith.constant dense<0xFF800000> : vector<8xf32>
    %24 = vector.multi_reduction <maximumf>, %23, %cst_17 [0] : vector<8x8xf32> to vector<8xf32>
    %25 = vector.shape_cast %24 : vector<8xf32> to vector<1x8xf32>
    %26 = arith.maximumf %21, %25 : vector<1x8xf32>
    %c0_18 = arith.constant 0 : index
    %c0_19 = arith.constant 0 : index
    %27 = vector.load %arg9[%c0_18, %c0_19] : memref<1x8xf32, #tpu.memory_space<vmem>>, vector<1x8xf32>
    tpu.vector_store %arg9[%c0_18, %c0_19], %26 {strides = array<i32>} : memref<1x8xf32, #tpu.memory_space<vmem>>, vector<1x8xf32>,
    %c0_20 = arith.constant 0 : index
    %c0_21 = arith.constant 0 : index
    %28 = vector.load %arg10[%c0_20, %c0_21] : memref<1x8xf32, #tpu.memory_space<vmem>>, vector<1x8xf32>
    %cst_22 = arith.constant 1.000000e+30 : f32
    %29 = vector.broadcast %cst_22 : f32 to vector<8x8xf32>
    %30 = arith.select %20, %29, %15 : vector<8x8xi1>, vector<8x8xf32>
    %cst_23 = arith.constant dense<0x7F800000> : vector<8xf32>
    %31 = vector.multi_reduction <minimumf>, %30, %cst_23 [0] : vector<8x8xf32> to vector<8xf32>
    %32 = vector.shape_cast %31 : vector<8xf32> to vector<1x8xf32>
    %33 = arith.minimumf %28, %32 : vector<1x8xf32>
    %c0_24 = arith.constant 0 : index
    %c0_25 = arith.constant 0 : index
    %34 = vector.load %arg10[%c0_24, %c0_25] : memref<1x8xf32, #tpu.memory_space<vmem>>, vector<1x8xf32>
    tpu.vector_store %arg10[%c0_24, %c0_25], %33 {strides = array<i32>} : memref<1x8xf32, #tpu.memory_space<vmem>>, vector<1x8xf32>,
    %c0_i32_26 = arith.constant 0 : i32
    %35 = arith.cmpi eq, %arg1, %c0_i32_26 : i32
    %36 = arith.extui %35 : i1 to i32
    %c0_i32_27 = arith.constant 0 : i32
    %37 = arith.cmpi ne, %36, %c0_i32_27 : i32
    scf.if %37 {
      %c0_28 = arith.constant 0 : index
      %c0_29 = arith.constant 0 : index
      %38 = vector.load %arg9[%c0_28, %c0_29] : memref<1x8xf32, #tpu.memory_space<vmem>>, vector<1x8xf32>
      %cst_30 = arith.constant 0.000000e+00 : f32
      %39 = vector.broadcast %cst_30 : f32 to vector<1x8xf32>
      %40 = arith.maximumf %38, %39 : vector<1x8xf32>
      %41 = math.sqrt %40 : vector<1x8xf32>
      %c0_31 = arith.constant 0 : index
      %c0_32 = arith.constant 0 : index
      %42 = vector.load %arg10[%c0_31, %c0_32] : memref<1x8xf32, #tpu.memory_space<vmem>>, vector<1x8xf32>
      %43 = math.sqrt %42 : vector<1x8xf32>
      %44 = arith.subf %41, %43 : vector<1x8xf32>
      %cst_33 = arith.constant 3.000000e-01 : f32
      %45 = vector.broadcast %cst_33 : f32 to vector<1x8xf32>
      %46 = arith.addf %44, %45 : vector<1x8xf32>
      %cst_34 = arith.constant 0.000000e+00 : f32
      %47 = vector.broadcast %cst_34 : f32 to vector<1x8xf32>
      %48 = arith.maximumf %46, %47 : vector<1x8xf32>
      %c0_35 = arith.constant 0 : index
      %c0_36 = arith.constant 0 : index
      %49 = vector.load %arg8[%c0_35, %c0_36] : memref<1x8xf32, #tpu.memory_space<vmem>>, vector<1x8xf32>
      tpu.vector_store %arg8[%c0_35, %c0_36], %48 {strides = array<i32>} : memref<1x8xf32, #tpu.memory_space<vmem>>, vector<1x8xf32>,
    } else {
    }
    return
  }
  func.func @transform_0(%arg0: i32, %arg1: i32) -> (i32, i32) {
    %c0_i32 = arith.constant 0 : i32
    %c0_i32_0 = arith.constant 0 : i32
    return %arg0, %c0_i32 : i32, i32
  }
  func.func @transform_1(%arg0: i32, %arg1: i32) -> (i32, i32) {
    %c0_i32 = arith.constant 0 : i32
    %c0_i32_0 = arith.constant 0 : i32
    return %c0_i32, %arg0 : i32, i32
  }
  func.func @transform_2(%arg0: i32, %arg1: i32) -> (i32, i32) {
    %c0_i32 = arith.constant 0 : i32
    %c0_i32_0 = arith.constant 0 : i32
    return %c0_i32, %arg0 : i32, i32
  }
  func.func @transform_3(%arg0: i32, %arg1: i32) -> (i32, i32) {
    %c0_i32 = arith.constant 0 : i32
    %c0_i32_0 = arith.constant 0 : i32
    return %arg1, %c0_i32 : i32, i32
  }
  func.func @transform_4(%arg0: i32, %arg1: i32) -> (i32, i32) {
    %c0_i32 = arith.constant 0 : i32
    %c0_i32_0 = arith.constant 0 : i32
    return %arg1, %c0_i32 : i32, i32
  }
  func.func @transform_5(%arg0: i32, %arg1: i32) -> (i32, i32) {
    %c0_i32 = arith.constant 0 : i32
    %c0_i32_0 = arith.constant 0 : i32
    return %arg1, %c0_i32 : i32, i32
  }
  func.func @transform_6(%arg0: i32, %arg1: i32) -> (i32, i32) {
    %c0_i32 = arith.constant 0 : i32
    %c0_i32_0 = arith.constant 0 : i32
    return %c0_i32, %arg0 : i32, i32
  }
}

</mosaic_0001>

<llo_original>
// kernel: triplet_loss.1
$region0: #{triplet_loss.1}
  #allocation0 [shape = 'u32[]', space=smem, size = 0x4, offset = 0x4, fixed_abs, tag = 'smem constant byte address 0x4 - core index']
  #allocation1 [shape = 'u32[144,128]{1,0:T(1,128)}', space=vmem, size = 0x12000, scoped, tag = 'internal scratch']
  #allocation2 [shape = 'f32[1,8]{1,0:T(1,128)}', space=vmem, size = 0x200, scoped, tag = 'scratch operand']
  #allocation3 [shape = 'f32[1,8]{1,0:T(1,128)}', space=vmem, size = 0x200, scoped, tag = 'scratch operand']
  %s0 = inlined_call_operand.vmem [shape: f32[8,32], index: 0, kind: input, shape index: {}, may-alias: {0,3}]
  %s1 = inlined_call_operand.vmem [shape: s32[1,8], index: 1, kind: input, shape index: {}]
  %s2 = inlined_call_operand.vmem [shape: f32[1,8], index: 2, kind: input, shape index: {}]
  %s3 = inlined_call_operand.vmem [shape: f32[8,32], index: 3, kind: input, shape index: {}, may-alias: {0,3}]
  %s4 = inlined_call_operand.vmem [shape: s32[8,1], index: 4, kind: input, shape index: {}]
  %s5 = inlined_call_operand.vmem [shape: f32[8,1], index: 5, kind: input, shape index: {}]
  %s6 = inlined_call_operand.vmem [shape: f32[1,8], index: 6, kind: output, shape index: {}]
  %s7 = sld [smem:[#allocation0]]
  $region42: #{triplet_loss.1} parent=0
    _
  %s9 = ssub.s32 1, %s7
  %s10 = scalar_select 0, %s9, %s7
  // Predicated region
  $region2: #{triplet_loss.1} parent=0 // pred_check
    _
  $region3: #{triplet_loss.1} parent=0 // pred_check_branch
    %12 = sbr.rel (0) target = $region5
  $region4: #{triplet_loss.1} parent=0 // pred_region
    _
  $region5: #{triplet_loss.1} parent=0 // pred_fallthru
    _
  // Predicated region
  $region6: #{triplet_loss.1} parent=0 // pred_check
    _
  $region7: #{triplet_loss.1} parent=0 // pred_check_branch
    %14 = sbr.rel (0) target = $region9
  $region8: #{triplet_loss.1} parent=0 // pred_region
    _
  $region9: #{triplet_loss.1} parent=0 // pred_fallthru
    _
  // Predicated region
  $region10: #{triplet_loss.1} parent=0 // pred_check
    _
  $region11: #{triplet_loss.1} parent=0 // pred_check_branch
    %16 = sbr.rel (0) target = $region13
  $region12: #{triplet_loss.1} parent=0 // pred_region
    _
  $region13: #{triplet_loss.1} parent=0 // pred_fallthru
    _
  // Predicated region
  $region14: #{triplet_loss.1} parent=0 // pred_check
    _
  $region15: #{triplet_loss.1} parent=0 // pred_check_branch
    %18 = sbr.rel (0) target = $region17
  $region16: #{triplet_loss.1} parent=0 // pred_region
    _
  $region17: #{triplet_loss.1} parent=0 // pred_fallthru
    _
  // Predicated region
  $region18: #{triplet_loss.1} parent=0 // pred_check
    _
  $region19: #{triplet_loss.1} parent=0 // pred_check_branch
    %20 = sbr.rel (0) target = $region21
  $region20: #{triplet_loss.1} parent=0 // pred_region
    _
  $region21: #{triplet_loss.1} parent=0 // pred_fallthru
    _
  // Predicated region
  $region22: #{triplet_loss.1} parent=0 // pred_check
    _
  $region23: #{triplet_loss.1} parent=0 // pred_check_branch
    %22 = sbr.rel (0) target = $region25
  $region24: #{triplet_loss.1} parent=0 // pred_region
    _
  $region25: #{triplet_loss.1} parent=0 // pred_fallthru
    _
  %p23 = scmp.eq.s32.totalorder 0, 0
  // Predicated region
  $region26: #{triplet_loss.1} parent=0 // pred_check
    %p24 = pneg %p23
  $region27: #{triplet_loss.1} parent=0 // pred_check_branch
    %26 = sbr.rel (%p24) target = $region29
  $region28: #{triplet_loss.1} parent=0 // pred_region
    %vm27 = vcmask 57344
    %28 = vst.msk [vmem:[#allocation2] sm:$0x1] %vm27, -1e+30
    %29 = vst.msk [vmem:[#allocation3] sm:$0x1] %vm27, 1e+30
  $region29: #{triplet_loss.1} parent=0 // pred_fallthru
    _
  %v30 = vld [vmem:[%s3] sm:$0xff]
  %v31 = vld [vmem:[%s0] sm:$0xff]
  %vm32 = vcmask 261120
  %v34 = vsel %vm32, %v30, 0
  %v37 = vsel %vm32, %v31, 0
  %39 = vmatprep.subr.mxu0 0.0
  %40 = vmatpush1.xpose.msra.mxu0 0.0
  %41 = vmatprep.subr.mxu0 0.0
  %42 = vmatpush1.xpose.msra.mxu0 0.0
  %43 = vmatprep.subr.mxu0 0.0
  %44 = vmatpush1.xpose.msra.mxu0 0.0
  %45 = vmatprep.subr.mxu0 0.0
  %46 = vmatpush1.xpose.msra.mxu0 0.0
  %47 = vmatprep.subr.mxu0 0.0
  %48 = vmatpush1.xpose.msra.mxu0 0.0
  %49 = vmatprep.subr.mxu0 0.0
  %50 = vmatpush1.xpose.msra.mxu0 0.0
  %51 = vmatprep.subr.mxu0 0.0
  %52 = vmatpush1.xpose.msra.mxu0 0.0
  %53 = vmatprep.subr.mxu0 0.0
  %54 = vmatpush1.xpose.msra.mxu0 0.0
  %55 = vmatprep.subr.mxu0 0.0
  %56 = vmatpush1.xpose.msra.mxu0 0.0
  %57 = vmatprep.subr.mxu0 0.0
  %58 = vmatpush1.xpose.msra.mxu0 0.0
  %59 = vmatprep.subr.mxu0 0.0
  %60 = vmatpush1.xpose.msra.mxu0 0.0
  %61 = vmatprep.subr.mxu0 0.0
  %62 = vmatpush1.xpose.msra.mxu0 0.0
  %63 = vmatprep.subr.mxu0 0.0
  %64 = vmatpush1.xpose.msra.mxu0 0.0
  %65 = vmatprep.subr.mxu0 0.0
  %66 = vmatpush1.xpose.msra.mxu0 0.0
  %67 = vmatprep.subr.mxu0 0.0
  %68 = vmatpush1.xpose.msra.mxu0 0.0
  %69 = vmatprep.subr.mxu0 0.0
  %70 = vmatpush1.xpose.msra.mxu0 %v37
  %71 = vmatprep.subr.mxu0 0.0
  %72 = vmatpush2.xpose.msra.mxu0 0.0
  %73 = vmatprep.subr.mxu0 0.0
  %74 = vmatpush2.xpose.msra.mxu0 0.0
  %75 = vmatprep.subr.mxu0 0.0
  %76 = vmatpush2.xpose.msra.mxu0 0.0
  %77 = vmatprep.subr.mxu0 0.0
  %78 = vmatpush2.xpose.msra.mxu0 0.0
  %79 = vmatprep.subr.mxu0 0.0
  %80 = vmatpush2.xpose.msra.mxu0 0.0
  %81 = vmatprep.subr.mxu0 0.0
  %82 = vmatpush2.xpose.msra.mxu0 0.0
  %83 = vmatprep.subr.mxu0 0.0
  %84 = vmatpush2.xpose.msra.mxu0 0.0
  %85 = vmatprep.subr.mxu0 0.0
  %86 = vmatpush2.xpose.msra.mxu0 0.0
  %87 = vmatprep.subr.mxu0 0.0
  %88 = vmatpush2.xpose.msra.mxu0 0.0
  %89 = vmatprep.subr.mxu0 0.0
  %90 = vmatpush2.xpose.msra.mxu0 0.0
  %91 = vmatprep.subr.mxu0 0.0
  %92 = vmatpush2.xpose.msra.mxu0 0.0
  %93 = vmatprep.subr.mxu0 0.0
  %94 = vmatpush2.xpose.msra.mxu0 0.0
  %95 = vmatprep.subr.mxu0 0.0
  %96 = vmatpush2.xpose.msra.mxu0 0.0
  %97 = vmatprep.subr.mxu0 0.0
  %98 = vmatpush2.xpose.msra.mxu0 0.0
  %99 = vmatprep.subr.mxu0 0.0
  %100 = vmatpush2.xpose.msra.mxu0 0.0
  %101 = vmatprep.subr.mxu0 0.0
  %102 = vmatpush2.xpose.msra.mxu0 0.0
  %103 = vmatprep.mubr.f32.mxu0 0.0
  %104 = vmatmul.mubr.f32.gmra.mxu0 %v34
  %v105 = vpop.f32.mrf.mxu0
  %v106 = vadd.f32 0.0, %v105
  %v107 = vpop.f32.mrf.mxu0
  %108 = vdwg.mxu0
  %v109 = vld [vmem:[%s5] sm:$0xff]
  %v110 = vld [vmem:[%s2] sm:$0x1]
  %112 = vset.pattern.permute.xlu0 0
  %113 = vperm.xlu0 %112, %v109
  %v114 = vpop.permute.xlu0 %113
  %v117 = vlaneseq
  %v118 = vshrl.u32 %v117, 7
  %v119 = vsub.s32 0, %v118
  %v120 = vrot.slane %v110, %v119
  %v122 = vadd.f32 %v114, %v120
  %v123 = vmul.f32 %v106, 2.0
  %v124 = vsub.f32 %v122, %v123
  %v125 = vmax.f32 %v124, 1e-12
  %v126 = vld [vmem:[%s4] sm:$0xff]
  %v127 = vld [vmem:[%s1] sm:$0x1]
  %128 = vset.pattern.permute.xlu0 0
  %129 = vperm.xlu0 %128, %v126
  %v130 = vpop.permute.xlu0 %129
  %v131 = vlaneseq
  %v132 = vshrl.u32 %v131, 7
  %v133 = vsub.s32 0, %v132
  %v134 = vrot.slane %v127, %v133
  %vm135 = vcmp.eq.s32.totalorder %v130, %v134
  %v136 = vld [vmem:[#allocation2] sm:$0x1]
  %v137 = vsel %vm135, %v125, -1e+30
  %vm138 = vcmask 64512
  %v139 = vsel %vm138, %v137, -inf
  %v140 = vrot.slane %v139, 4
  %v141 = vmax.f32 %v139, %v140
  %v142 = vrot.slane %v141, 2
  %v143 = vmax.f32 %v141, %v142
  %v144 = vrot.slane %v143, 1
  %v145 = vmax.f32 %v143, %v144
  %v146 = vmax.f32 %v136, %v145
  %vm147 = vcmask 57344
  %148 = vst.msk [vmem:[#allocation2] sm:$0x1] %vm147, %v146
  %v149 = vld [vmem:[#allocation3] sm:$0x1]
  %v150 = vsel %vm135, 1e+30, %v125
  %v151 = vsel %vm138, %v150, inf
  %v152 = vrot.slane %v151, 4
  %v153 = vmin.f32 %v151, %v152
  %v154 = vrot.slane %v153, 2
  %v155 = vmin.f32 %v153, %v154
  %v156 = vrot.slane %v155, 1
  %v157 = vmin.f32 %v155, %v156
  %v158 = vmin.f32 %v149, %v157
  %159 = vst.msk [vmem:[#allocation3] sm:$0x1] %vm147, %v158
  // Predicated region
  $region30: #{triplet_loss.1} parent=0 // pred_check
    %p160 = pneg %p23
  $region31: #{triplet_loss.1} parent=0 // pred_check_branch
    %162 = sbr.rel (%p160) target = $region33
  $region32: #{triplet_loss.1} parent=0 // pred_region
    %v163 = vld [vmem:[#allocation2] sm:$0x1]
    %v164 = vmax.f32 %v163, 0.0
    %v165 = vrsqrt.pop %v164
    %v166 = vmul.f32 %v164, %v165
    %vm167 = vcmp.eq.f32.partialorder %v164, inf
    %v168 = vsel %vm167, %v164, %v166
    %vm169 = vcmp.eq.f32.partialorder %v164, 0.0
    %v170 = vand.u32 %v164, 2147483648
    %v171 = vsel %vm169, %v170, %v168
    %v172 = vld [vmem:[#allocation3] sm:$0x1]
    %v173 = vrsqrt.pop %v172
    %v174 = vmul.f32 %v172, %v173
    %vm175 = vcmp.eq.f32.partialorder %v172, inf
    %v176 = vsel %vm175, %v172, %v174
    %vm177 = vcmp.eq.f32.partialorder %v172, 0.0
    %v178 = vand.u32 %v172, 2147483648
    %v179 = vsel %vm177, %v178, %v176
    %v180 = vsub.f32 %v171, %v179
    %v181 = vadd.f32 %v180, 0.3
    %v182 = vmax.f32 %v181, 0.0
    %183 = vst.msk [vmem:[%s6] sm:$0x1] %vm147, %v182
  $region33: #{triplet_loss.1} parent=0 // pred_fallthru
    _
  // Predicated region
  $region34: #{triplet_loss.1} parent=0 // pred_check
    _
  $region35: #{triplet_loss.1} parent=0 // pred_check_branch
    %185 = sbr.rel (0) target = $region37
  $region36: #{triplet_loss.1} parent=0 // pred_region
    _
  $region37: #{triplet_loss.1} parent=0 // pred_fallthru
    _
  // Predicated region
  $region38: #{triplet_loss.1} parent=0 // pred_check
    _
  $region39: #{triplet_loss.1} parent=0 // pred_check_branch
    %187 = sbr.rel (0) target = $region41
  $region40: #{triplet_loss.1} parent=0 // pred_region
    _
  $region41: #{triplet_loss.1} parent=0 // pred_fallthru
    _

</llo_original>
